<compile_context>
chip_gen: v7x
topology: tpu7x:2x2x1
jax: 0.10.0
libtpu: 0.0.40
codegen_flags: <defaults>
</compile_context>

<pallas_src>
import functools
import math

import jax
import jax.numpy as jnp
from jax.experimental import pallas as pl
from jax.experimental.pallas import tpu as pltpu

F32 = jnp.float32
BF16 = jnp.bfloat16
BN_EPS = 1e-5


def _round_up(x, m):
    return (x + m - 1) // m * m


def _pad_to(x, shape):
    pads = [(0, t - s) for s, t in zip(x.shape, shape)]
    if any(p[1] for p in pads):
        return jnp.pad(x, pads)
    return x


# --------------------------------------------------------------------------
# Pallas kernels
# --------------------------------------------------------------------------

def _mm_fused_kernel(a_ref, w_ref, s_ref, b_ref, o_ref, *, relu):
    """o = [relu](a @ w * scale + bias); bf16 inputs, f32 accumulate."""
    acc = jnp.dot(a_ref[...], w_ref[...], preferred_element_type=jnp.float32)
    y = acc * s_ref[...] + b_ref[...]
    if relu:
        y = jnp.maximum(y, 0.0)
    o_ref[...] = y


def pallas_matmul_fused(a, w_p, scale_p, bias_p, relu, tm_max=128):
    """relu(a @ w * scale + bias).

    a: [M, K] (any float).  w_p: [Kp, Np] bf16, scale_p/bias_p: [1, Np] f32,
    all pre-padded to 128 multiples.  K is carried as a single panel (fits VMEM
    for all ResNet-18/34 shapes, Kp <= 2304).  Returns padded [Mp, Np] f32.
    """
    M, K = a.shape
    Kp, Np = w_p.shape
    tm = tm_max if M > tm_max else _round_up(max(M, 1), 8)
    Mp = _round_up(M, tm)
    tn = 128  # keep >=2 parallel Cout blocks for dual-TC chips; v6e could use 256
    a_bf = _pad_to(a.astype(BF16), (Mp, Kp))
    out = pl.pallas_call(
        functools.partial(_mm_fused_kernel, relu=relu),
        out_shape=jax.ShapeDtypeStruct((Mp, Np), F32),
        grid=(Mp // tm, Np // tn),
        in_specs=[pl.BlockSpec((tm, Kp), lambda i, j: (i, 0)),
                  pl.BlockSpec((Kp, tn), lambda i, j: (0, j)),
                  pl.BlockSpec((1, tn), lambda i, j: (0, j)),
                  pl.BlockSpec((1, tn), lambda i, j: (0, j))],
        out_specs=pl.BlockSpec((tm, tn), lambda i, j: (i, j)),
        compiler_params=pltpu.CompilerParams(
            dimension_semantics=("parallel", "parallel")),
    )(a_bf, w_p, scale_p, bias_p)
    return out


def _shift_conv_kernel(*refs, wp, relu, has_res):
    """Direct stride-1 3x3 conv on the flattened padded activation.

    out[p] = sum_t X[p + ki*Wp + kj] @ W[t], fused with BN affine
    (+ residual)(+ ReLU).  Reads blocks i and i+1 of X; taps are 9 static
    shifted slices of their concatenation, so no im2col tensor exists in HBM.
    """
    if has_res:
        xa_ref, xb_ref, w_ref, s_ref, b_ref, r_ref, o_ref = refs
    else:
        xa_ref, xb_ref, w_ref, s_ref, b_ref, o_ref = refs
        r_ref = None
    tm = xa_ref.shape[0]
    x2 = jnp.concatenate([xa_ref[...], xb_ref[...]], axis=0)   # [2*tm, Cin_p]
    acc = jnp.zeros(o_ref.shape, jnp.float32)
    for t in range(9):
        ki, kj = divmod(t, 3)
        d = ki * wp + kj                        # static element shift
        xt = x2[d:d + tm, :].astype(BF16)       # tap window -> MXU input
        acc = acc + jnp.dot(xt, w_ref[t], preferred_element_type=jnp.float32)
    y = acc * s_ref[...] + b_ref[...]
    if r_ref is not None:
        y = y + r_ref[...]
    if relu:
        y = jnp.maximum(y, 0.0)
    o_ref[...] = y


def conv3x3_s1_fused(x_nhwc, w9_p, scale_p, bias_p, cout, residual=None,
                     relu=True, tm_max=128):
    """Stride-1 pad-1 3x3 conv, fused BN affine (+ residual add)(+ ReLU)."""
    N, H, W, Cin = x_nhwc.shape
    Hp, Wp = H + 2, W + 2
    _, Cin_p, Cout_p = w9_p.shape
    M = N * Hp * Wp
    halo = 2 * Wp + 2                                  # max tap shift
    tm = tm_max if M > tm_max else _round_up(M, 8)
    tm = max(tm, _round_up(halo, 8))                   # window must cover halo
    Mp = _round_up(M, tm)
    tn = 128

    x_flat = jnp.pad(x_nhwc.astype(F32),
                     ((0, 0), (1, 1), (1, 1), (0, 0))).reshape(M, Cin)
    x_flat = _pad_to(x_flat, (Mp + tm, Cin_p))         # +1 tile so block i+1 exists

    in_specs = [pl.BlockSpec((tm, Cin_p), lambda i, j: (i, 0)),
                pl.BlockSpec((tm, Cin_p), lambda i, j: (i + 1, 0)),
                pl.BlockSpec((9, Cin_p, tn), lambda i, j: (0, 0, j)),
                pl.BlockSpec((1, tn), lambda i, j: (0, j)),
                pl.BlockSpec((1, tn), lambda i, j: (0, j))]
    args = [x_flat, x_flat, w9_p, scale_p, bias_p]
    has_res = residual is not None
    if has_res:
        # output row p = n*Hp*Wp + oh*Wp + ow  ->  pad residual bottom/right by 2
        r = jnp.pad(residual.astype(F32), ((0, 0), (0, 2), (0, 2), (0, 0)))
        r = _pad_to(r.reshape(M, residual.shape[-1]), (Mp, Cout_p))
        in_specs.append(pl.BlockSpec((tm, tn), lambda i, j: (i, j)))
        args.append(r)

    out = pl.pallas_call(
        functools.partial(_shift_conv_kernel, wp=Wp, relu=relu, has_res=has_res),
        out_shape=jax.ShapeDtypeStruct((Mp, Cout_p), F32),
        grid=(Mp // tm, Cout_p // tn),
        in_specs=in_specs,
        out_specs=pl.BlockSpec((tm, tn), lambda i, j: (i, j)),
        compiler_params=pltpu.CompilerParams(
            dimension_semantics=("parallel", "parallel")),
    )(*args)
    return out[:M].reshape(N, Hp, Wp, Cout_p)[:, :H, :W, :cout]


def _max9_kernel(x_ref, o_ref):
    o_ref[...] = jnp.max(x_ref[...], axis=0)


def pallas_max9(stacked, M, C):
    """stacked: [9, M, C] -> elementwise max over leading axis -> [M, C]."""
    Mp = _round_up(M, 8)
    tm = 512 if Mp > 512 else Mp
    Mp = _round_up(Mp, tm)
    Cp = _round_up(C, 128)
    x_p = jnp.full((9, Mp, Cp), -jnp.inf, F32).at[:, :M, :C].set(
        stacked.astype(F32))
    out = pl.pallas_call(
        _max9_kernel,
        out_shape=jax.ShapeDtypeStruct((Mp, Cp), F32),
        grid=(Mp // tm,),
        in_specs=[pl.BlockSpec((9, tm, Cp), lambda i: (0, i, 0))],
        out_specs=pl.BlockSpec((tm, Cp), lambda i: (i, 0)),
    )(x_p)
    return out[:M, :C]


def _avgpool_kernel(x_ref, o_ref):
    o_ref[...] = jnp.mean(x_ref[...], axis=1)


def pallas_global_avgpool(x3):
    """x3: [N, HW, C] -> mean over HW -> [N, C]."""
    N, HW, C = x3.shape
    Cp = _round_up(C, 128)
    x_p = _pad_to(x3.astype(F32), (N, HW, Cp))
    out = pl.pallas_call(
        _avgpool_kernel,
        out_shape=jax.ShapeDtypeStruct((N, Cp), F32),
        grid=(1,),
        in_specs=[pl.BlockSpec((N, HW, Cp), lambda i: (0, 0, 0))],
        out_specs=pl.BlockSpec((N, Cp), lambda i: (0, 0)),
    )(x_p)
    return out[:, :C]


# --------------------------------------------------------------------------
# Conv / pool glue (slicing + reshapes only; all compute runs in Pallas)
# --------------------------------------------------------------------------

def conv_im2col_fused(x_nhwc, wmat_p, scale_p, bias_p, kh, kw, stride, pad,
                      cout, relu):
    """Strided conv via bf16 im2col + fused matmul (stem, stride-2 3x3)."""
    N, H, W, Cin = x_nhwc.shape
    OH = (H + 2 * pad - kh) // stride + 1
    OW = (W + 2 * pad - kw) // stride + 1
    xp = jnp.pad(x_nhwc, ((0, 0), (pad, pad), (pad, pad), (0, 0))).astype(BF16)
    patches = [xp[:, ki:ki + stride * OH:stride, kj:kj + stride * OW:stride, :]
               for ki in range(kh) for kj in range(kw)]
    a = jnp.concatenate(patches, axis=-1).reshape(N * OH * OW, kh * kw * Cin)
    out = pallas_matmul_fused(a, wmat_p, scale_p, bias_p, relu=relu)
    return out[:N * OH * OW, :cout].reshape(N, OH, OW, cout)


def conv1x1_fused(x_nhwc, wmat_p, scale_p, bias_p, stride, cout, relu):
    """1x1 (possibly strided) conv = strided slice + fused matmul (downsample)."""
    xs = x_nhwc[:, ::stride, ::stride, :]
    N, OH, OW, Cin = xs.shape
    a = xs.reshape(N * OH * OW, Cin)
    out = pallas_matmul_fused(a, wmat_p, scale_p, bias_p, relu=relu)
    return out[:N * OH * OW, :cout].reshape(N, OH, OW, cout)


def maxpool_3x3_s2_p1(x_nhwc):
    N, H, W, C = x_nhwc.shape
    xp = jnp.pad(x_nhwc, ((0, 0), (1, 1), (1, 1), (0, 0)),
                 constant_values=-jnp.inf)
    OH = (H + 2 - 3) // 2 + 1
    OW = (W + 2 - 3) // 2 + 1
    slices = [xp[:, ki:ki + 2 * OH:2, kj:kj + 2 * OW:2, :]
              for ki in range(3) for kj in range(3)]
    stk = jnp.stack(slices, axis=0).reshape(9, N * OH * OW, C)
    out = pallas_max9(stk, N * OH * OW, C)
    return out.reshape(N, OH, OW, C)


# --------------------------------------------------------------------------
# Parameter init (deterministic, mirrors torchvision defaults).  Weights are
# reshaped / padded / cast to bf16 once here.
# --------------------------------------------------------------------------

def _conv_init(key, kh, kw, cin, cout):
    fan_out = kh * kw * cout
    std = math.sqrt(2.0 / fan_out)  # kaiming_normal_(mode='fan_out', relu)
    return jax.random.normal(key, (kh, kw, cin, cout), F32) * std


def _bn_affine(c, cp, zero=False):
    gamma = jnp.zeros((c,), F32) if zero else jnp.ones((c,), F32)
    beta = jnp.zeros((c,), F32)
    running_mean = jnp.zeros((c,), F32)
    running_var = jnp.ones((c,), F32)
    scale = gamma / jnp.sqrt(running_var + BN_EPS)
    bias = beta - running_mean * scale
    return (_pad_to(scale.reshape(1, c), (1, cp)),
            _pad_to(bias.reshape(1, c), (1, cp)))


def _w_im2col(w):  # (kh,kw,cin,cout) -> bf16 [round_up(kh*kw*cin,128), round_up(cout,128)]
    kh, kw, cin, cout = w.shape
    m = w.reshape(kh * kw * cin, cout).astype(BF16)
    return _pad_to(m, (_round_up(kh * kw * cin, 128), _round_up(cout, 128)))


def _w_shift(w):   # (3,3,cin,cout) -> bf16 [9, round_up(cin,128), round_up(cout,128)]
    _, _, cin, cout = w.shape
    m = w.reshape(9, cin, cout).astype(BF16)
    return _pad_to(m, (9, _round_up(cin, 128), _round_up(cout, 128)))


def init_resnet_params(key, layers, num_classes, zero_init_residual):
    keys = iter(jax.random.split(key, 256))
    params = {}
    params["conv1_w"] = _w_im2col(_conv_init(next(keys), 7, 7, 3, 64))
    params["bn1"] = _bn_affine(64, 128)

    stages = []
    in_planes = 64
    stage_cfg = [(64, 1), (128, 2), (256, 2), (512, 2)]
    for (planes, stage_stride), n_blocks in zip(stage_cfg, layers):
        blocks = []
        for b in range(n_blocks):
            stride = stage_stride if b == 0 else 1
            cp = _round_up(planes, 128)
            w1 = _conv_init(next(keys), 3, 3, in_planes, planes)
            w2 = _conv_init(next(keys), 3, 3, planes, planes)
            bp = {
                "stride": stride,
                "planes": planes,
                "conv1_w": _w_shift(w1) if stride == 1 else _w_im2col(w1),
                "bn1": _bn_affine(planes, cp),
                "conv2_w": _w_shift(w2),
                "bn2": _bn_affine(planes, cp, zero=zero_init_residual),
            }
            if stride != 1 or in_planes != planes:
                wd = _conv_init(next(keys), 1, 1, in_planes, planes)
                bp["down_w"] = _pad_to(
                    wd.reshape(in_planes, planes).astype(BF16),
                    (_round_up(in_planes, 128), cp))
                bp["down_bn"] = _bn_affine(planes, cp)
            blocks.append(bp)
            in_planes = planes
        stages.append(blocks)
    params["stages"] = stages

    fc_in = 512
    ncp = _round_up(num_classes, 128)
    bound = 1.0 / math.sqrt(fc_in)
    fc_w = jax.random.uniform(next(keys), (fc_in, num_classes), F32,
                              minval=-bound, maxval=bound)
    fc_b = jax.random.uniform(next(keys), (num_classes,), F32,
                              minval=-bound, maxval=bound)
    params["fc_w"] = _pad_to(fc_w.astype(BF16), (fc_in, ncp))
    params["fc_scale"] = jnp.ones((1, ncp), F32)
    params["fc_bias"] = _pad_to(fc_b.reshape(1, num_classes), (1, ncp))
    params["num_classes"] = num_classes
    return params


# --------------------------------------------------------------------------
# Forward pass
# --------------------------------------------------------------------------

def basic_block(x, bp):
    stride = bp["stride"]
    planes = bp["planes"]
    if stride == 1:
        out = conv3x3_s1_fused(x, bp["conv1_w"], *bp["bn1"], cout=planes,
                               relu=True)
    else:
        out = conv_im2col_fused(x, bp["conv1_w"], *bp["bn1"], 3, 3, stride, 1,
                                cout=planes, relu=True)
    if "down_w" in bp:
        identity = conv1x1_fused(x, bp["down_w"], *bp["down_bn"], stride,
                                 cout=planes, relu=False)
    else:
        identity = x
    # conv2 + bn2 + residual add + ReLU all fused into one kernel epilogue
    out = conv3x3_s1_fused(out, bp["conv2_w"], *bp["bn2"], cout=planes,
                           residual=identity, relu=True)
    return out


def resnet_forward(params, x_nchw):
    x = jnp.transpose(x_nchw.astype(F32), (0, 2, 3, 1))  # NCHW -> NHWC
    x = conv_im2col_fused(x, params["conv1_w"], *params["bn1"], 7, 7, 2, 3,
                          cout=64, relu=True)
    x = maxpool_3x3_s2_p1(x)
    for stage in params["stages"]:
        for bp in stage:
            x = basic_block(x, bp)
    N, H, W, C = x.shape
    feat = pallas_global_avgpool(x.reshape(N, H * W, C))          # [N, 512]
    logits = pallas_matmul_fused(feat, params["fc_w"], params["fc_scale"],
                                 params["fc_bias"], relu=False)    # bias fused
    return logits[:N, :params["num_classes"]]


class ResNetLayersPallas:
    """Pallas equivalent of ResNetLayers(layer0, layer1, layer2, layer3, ...)."""

    def __init__(self, layer0, layer1, layer2, layer3, num_classes,
                 zero_init_residual, key):
        self.params = init_resnet_params(
            key, [layer0, layer1, layer2, layer3], num_classes,
            zero_init_residual)

    def __call__(self, x_nchw):
        return resnet_forward(self.params, x_nchw)


# --------------------------------------------------------------------------

if __name__ == "__main__":
    key = jax.random.PRNGKey(0)
    k_param, k_data = jax.random.split(key)

    # Small, deterministic example input (PyTorch NCHW convention).
    x = jax.random.normal(k_data, (2, 3, 32, 32), F32)

    model = ResNetLayersPallas(layer0=1, layer1=1, layer2=1, layer3=1,
                               num_classes=10, zero_init_residual=True,
                               key=k_param)
    logits = model(x)
    logits = jax.block_until_ready(logits)
    assert logits.shape == (2, 10), logits.shape
    assert bool(jnp.all(jnp.isfinite(logits)))
    print("KERNEL_OK")
</pallas_src>

<mosaic_0001>
module attributes {stable_mosaic.version = 11 : i64} {
  func.func @_mm_fused_kernel(%arg0: i32, %arg1: i32, %arg2: memref<128x256xbf16, #tpu.memory_space<vmem>>, %arg3: memref<256x128xbf16, #tpu.memory_space<vmem>>, %arg4: memref<1x128xf32, #tpu.memory_space<vmem>>, %arg5: memref<1x128xf32, #tpu.memory_space<vmem>>, %arg6: memref<128x128xf32, #tpu.memory_space<vmem>>) attributes {dimension_semantics = [#tpu.dimension_semantics<parallel>, #tpu.dimension_semantics<parallel>], iteration_bounds = array<i64: 4, 1>, scalar_prefetch = 0 : i64, scratch_operands = 0 : i64, tpu.core_type = #tpu.core_type<tc>, window_params = [{transform_indices = @transform_0, window_bounds = array<i64: 128, 256>}, {transform_indices = @transform_1, window_bounds = array<i64: 256, 128>}, {transform_indices = @transform_2, window_bounds = array<i64: 1, 128>}, {transform_indices = @transform_3, window_bounds = array<i64: 1, 128>}, {transform_indices = @transform_4, window_bounds = array<i64: 128, 128>}]} {
    %c0 = arith.constant 0 : index
    %c0_0 = arith.constant 0 : index
    %0 = vector.load %arg2[%c0, %c0_0] : memref<128x256xbf16, #tpu.memory_space<vmem>>, vector<128x256xbf16>
    %c0_1 = arith.constant 0 : index
    %c0_2 = arith.constant 0 : index
    %1 = vector.load %arg3[%c0_1, %c0_2] : memref<256x128xbf16, #tpu.memory_space<vmem>>, vector<256x128xbf16>
    %cst = arith.constant dense<0.000000e+00> : vector<128x128xf32>
    %2 = tpu.matmul %0, %1, %cst {dimension_numbers = #tpu.dot_dimension_numbers<[1], [0], [0], [1], [0, 0, 1, 1], [], []>} : vector<128x256xbf16>, vector<256x128xbf16>, vector<128x128xf32> -> vector<128x128xf32>
    %c0_3 = arith.constant 0 : index
    %c0_4 = arith.constant 0 : index
    %3 = vector.load %arg4[%c0_3, %c0_4] : memref<1x128xf32, #tpu.memory_space<vmem>>, vector<1x128xf32>
    %4 = vector.broadcast %3 : vector<1x128xf32> to vector<128x128xf32>
    %5 = arith.mulf %2, %4 : vector<128x128xf32>
    %c0_5 = arith.constant 0 : index
    %c0_6 = arith.constant 0 : index
    %6 = vector.load %arg5[%c0_5, %c0_6] : memref<1x128xf32, #tpu.memory_space<vmem>>, vector<1x128xf32>
    %7 = vector.broadcast %6 : vector<1x128xf32> to vector<128x128xf32>
    %8 = arith.addf %5, %7 : vector<128x128xf32>
    %cst_7 = arith.constant 0.000000e+00 : f32
    %9 = vector.broadcast %cst_7 : f32 to vector<128x128xf32>
    %10 = arith.maximumf %8, %9 : vector<128x128xf32>
    %c0_8 = arith.constant 0 : index
    %c0_9 = arith.constant 0 : index
    %11 = vector.load %arg6[%c0_8, %c0_9] : memref<128x128xf32, #tpu.memory_space<vmem>>, vector<128x128xf32>
    tpu.vector_store %arg6[%c0_8, %c0_9], %10 {strides = array<i32>} : memref<128x128xf32, #tpu.memory_space<vmem>>, vector<128x128xf32>,
    return
  }
  func.func @transform_0(%arg0: i32, %arg1: i32) -> (i32, i32) {
    %c0_i32 = arith.constant 0 : i32
    %c0_i32_0 = arith.constant 0 : i32
    return %arg0, %c0_i32 : i32, i32
  }
  func.func @transform_1(%arg0: i32, %arg1: i32) -> (i32, i32) {
    %c0_i32 = arith.constant 0 : i32
    %c0_i32_0 = arith.constant 0 : i32
    return %c0_i32, %arg1 : i32, i32
  }
  func.func @transform_2(%arg0: i32, %arg1: i32) -> (i32, i32) {
    %c0_i32 = arith.constant 0 : i32
    %c0_i32_0 = arith.constant 0 : i32
    return %c0_i32, %arg1 : i32, i32
  }
  func.func @transform_3(%arg0: i32, %arg1: i32) -> (i32, i32) {
    %c0_i32 = arith.constant 0 : i32
    %c0_i32_0 = arith.constant 0 : i32
    return %c0_i32, %arg1 : i32, i32
  }
  func.func @transform_4(%arg0: i32, %arg1: i32) -> (i32, i32) {
    %c0_i32 = arith.constant 0 : i32
    return %arg0, %arg1 : i32, i32
  }
}

</mosaic_0001>

<llo_original>
// kernel: tpu_custom_call.1
$region0: #{tpu_custom_call.1}
  #allocation0 [shape = 'u32[]', space=smem, size = 0x4, offset = 0x4, fixed_abs, tag = 'smem constant byte address 0x4 - core index']
  #allocation1 [shape = 'u32[144,128]{1,0:T(1,128)}', space=vmem, size = 0x12000, scoped, tag = 'internal scratch']
  %s0 = inlined_call_operand.hbm [shape: bf16[512,256], index: 0, kind: input, shape index: {}]
  %s1 = inlined_call_operand.hbm [shape: bf16[256,128], index: 1, kind: input, shape index: {}]
  %s2 = inlined_call_operand.vmem [shape: f32[1,128], index: 2, kind: input, shape index: {}]
  %s3 = inlined_call_operand.vmem [shape: f32[1,128], index: 3, kind: input, shape index: {}]
  %s4 = inlined_call_operand.hbm [shape: f32[512,128], index: 4, kind: output, shape index: {}]
  %s5 = sld [smem:[#allocation0]]
  $region57: #{tpu_custom_call.1} parent=0
    _
  %s7 = ssub.s32 1, %s5
  %s8 = scalar_select 0, %s7, %s5
  $region1: #{tpu_custom_call.1} parent=0
    #allocation2 [shape = 'u8[131072]{0}', space=vmem, size = 0x20000, scoped, tag = 'input window, operand 0']
    #allocation3 [shape = 's32[2]{0}', space=sflag, size = 0x8, scoped, tag = 'scoped memory for tpu_custom_call.1']
    #allocation4 [shape = 's32[2]{0}', space=sflag, size = 0x8, scoped, tag = 'scoped memory for tpu_custom_call.1']
    #allocation5 [shape = 'u8[65536]{0}', space=vmem, size = 0x10000, scoped, tag = 'input window, operand 1, single buffered']
    #allocation6 [shape = 's32[1]{0}', space=sflag, size = 0x4, scoped, tag = 'scoped memory for tpu_custom_call.1']
    #allocation7 [shape = 'u8[131072]{0}', space=vmem, size = 0x20000, scoped, tag = 'output window, operand 0']
    %9 = vsyncpa [#allocation3], 0
    %s10 = scalar_lea.sflag [#allocation3], 1
    %11 = vsyncpa %s10, 0
    %12 = vsyncpa [#allocation6], 0
    %13 = vsyncpa [#allocation4], 0
    %s14 = scalar_lea.sflag [#allocation4], 1
    %15 = vsyncpa %s14, 0
    loop: start=0, step=1, limit=6
    $region2: #{tpu_custom_call.1} parent=1 // loop_pre_header
      _
    $region3: #{tpu_custom_call.1} parent=1 // loop_header
      %s17 = sphi 0, %s21
      %p18 = scmp.ge.s32.totalorder %s17, 6
      %s24 = sphi 0, %s36
      %s25 = sphi 0, %s32
      %s26 = sphi 0, %s24
      %s27 = sphi 0, %s25
      %s28 = sphi 0, %s26
      %s29 = sphi 0, %s27
      %s39 = sphi 0, %s41
      %s42 = sphi 0, %s39
      %s43 = sphi 0, %s42
      %s59 = sphi 0, %s43
      %s65 = sphi 0, %s67
      %s68 = sphi 0, %s65
      %s69 = sphi 0, %s68
      %s85 = sphi 0, %s69
      %s91 = sphi 0, %s93
      %s94 = sphi 0, %s91
      %s95 = sphi 0, %s94
      %s111 = sphi 0, %s95
      %s117 = sphi 0, %s119
      %s120 = sphi 0, %s117
      %s121 = sphi 0, %s120
      %s137 = sphi 0, %s121
      %s145 = sphi 0, %s147
      %s148 = sphi 0, %s145
      %s149 = sphi 0, %s148
      %s165 = sphi 0, %s149
    $region4: #{tpu_custom_call.1} parent=1 // loop_header_branch
      %20 = sbr.rel (%p18) target = $region8
    $region5: #{tpu_custom_call.1} parent=1 // loop_body
      %s22 = ssub.s32 %s17, 1
      %s23 = ssub.s32 %s17, 2
      %s30 = sadd.s32 1, %s25
      %p31 = scmp.ge.s32.totalorder %s30, 1
      %s32 = scalar_select %p31, 0, %s30
      %s33 = sadd.s32 1, %s24
      %s34 = scalar_select %p31, %s33, %s24
      %p35 = scmp.ge.s32.totalorder %s34, 4
      %s36 = scalar_select %p35, 0, %s34
      %s37 = ssub.s32 %s24, %s36
      %p38 = scmp.eq.s32.totalorder %s37, 0
      %s40 = sadd.s32 %s39, 1
      %s41 = scalar_select %p38, %s39, %s40
      %p44 = pneg %p38
      %p45 = scmp.eq.s32.totalorder %s17, 3
      %p46 = por %p44, %p45
      %p47 = scmp.ne.s32.totalorder %s39, %s42
      %p48 = scmp.eq.s32.totalorder %s17, 0
      %p49 = por %p47, %p48
      %p50 = scmp.ne.s32.totalorder %s39, %s42
      %p51 = scmp.eq.s32.totalorder %s22, 3
      %p52 = por %p50, %p51
      %p53 = scmp.ne.s32.totalorder %s42, %s43
      %p54 = scmp.eq.s32.totalorder %s22, 0
      %p55 = por %p53, %p54
      %p56 = scmp.ne.s32.totalorder %s42, %s43
      %p57 = scmp.eq.s32.totalorder %s23, 3
      %p58 = por %p56, %p57
      %p60 = scmp.ne.s32.totalorder %s43, %s59
      %p61 = scmp.eq.s32.totalorder %s23, 0
      %p62 = por %p60, %p61
      %s63 = ssub.s32 %s25, %s32
      %p64 = scmp.eq.s32.totalorder %s63, 0
      %s66 = sadd.s32 %s65, 1
      %s67 = scalar_select %p64, %s65, %s66
      %p70 = pneg %p64
      %p71 = scmp.eq.s32.totalorder %s17, 3
      %p72 = por %p70, %p71
      %p73 = scmp.ne.s32.totalorder %s65, %s68
      %p74 = scmp.eq.s32.totalorder %s17, 0
      %p75 = por %p73, %p74
      %p76 = scmp.ne.s32.totalorder %s65, %s68
      %p77 = scmp.eq.s32.totalorder %s22, 3
      %p78 = por %p76, %p77
      %p79 = scmp.ne.s32.totalorder %s68, %s69
      %p80 = scmp.eq.s32.totalorder %s22, 0
      %p81 = por %p79, %p80
      %p82 = scmp.ne.s32.totalorder %s68, %s69
      %p83 = scmp.eq.s32.totalorder %s23, 3
      %p84 = por %p82, %p83
      %p86 = scmp.ne.s32.totalorder %s69, %s85
      %p87 = scmp.eq.s32.totalorder %s23, 0
      %p88 = por %p86, %p87
      %s89 = ssub.s32 %s25, %s32
      %p90 = scmp.eq.s32.totalorder %s89, 0
      %s92 = sadd.s32 %s91, 1
      %s93 = scalar_select %p90, %s91, %s92
      %p96 = pneg %p90
      %p97 = scmp.eq.s32.totalorder %s17, 3
      %p98 = por %p96, %p97
      %p99 = scmp.ne.s32.totalorder %s91, %s94
      %p100 = scmp.eq.s32.totalorder %s17, 0
      %p101 = por %p99, %p100
      %p102 = scmp.ne.s32.totalorder %s91, %s94
      %p103 = scmp.eq.s32.totalorder %s22, 3
      %p104 = por %p102, %p103
      %p105 = scmp.ne.s32.totalorder %s94, %s95
      %p106 = scmp.eq.s32.totalorder %s22, 0
      %p107 = por %p105, %p106
      %p108 = scmp.ne.s32.totalorder %s94, %s95
      %p109 = scmp.eq.s32.totalorder %s23, 3
      %p110 = por %p108, %p109
      %p112 = scmp.ne.s32.totalorder %s95, %s111
      %p113 = scmp.eq.s32.totalorder %s23, 0
      %p114 = por %p112, %p113
      %s115 = ssub.s32 %s25, %s32
      %p116 = scmp.eq.s32.totalorder %s115, 0
      %s118 = sadd.s32 %s117, 1
      %s119 = scalar_select %p116, %s117, %s118
      %p122 = pneg %p116
      %p123 = scmp.eq.s32.totalorder %s17, 3
      %p124 = por %p122, %p123
      %p125 = scmp.ne.s32.totalorder %s117, %s120
      %p126 = scmp.eq.s32.totalorder %s17, 0
      %p127 = por %p125, %p126
      %p128 = scmp.ne.s32.totalorder %s117, %s120
      %p129 = scmp.eq.s32.totalorder %s22, 3
      %p130 = por %p128, %p129
      %p131 = scmp.ne.s32.totalorder %s120, %s121
      %p132 = scmp.eq.s32.totalorder %s22, 0
      %p133 = por %p131, %p132
      %p134 = scmp.ne.s32.totalorder %s120, %s121
      %p135 = scmp.eq.s32.totalorder %s23, 3
      %p136 = por %p134, %p135
      %p138 = scmp.ne.s32.totalorder %s121, %s137
      %p139 = scmp.eq.s32.totalorder %s23, 0
      %p140 = por %p138, %p139
      %s141 = ssub.s32 %s24, %s36
      %s142 = ssub.s32 %s25, %s32
      %s143 = sor.u32 %s141, %s142
      %p144 = scmp.eq.s32.totalorder %s143, 0
      %s146 = sadd.s32 %s145, 1
      %s147 = scalar_select %p144, %s145, %s146
      %p150 = pneg %p144
      %p151 = scmp.eq.s32.totalorder %s17, 3
      %p152 = por %p150, %p151
      %p153 = scmp.ne.s32.totalorder %s145, %s148
      %p154 = scmp.eq.s32.totalorder %s17, 0
      %p155 = por %p153, %p154
      %p156 = scmp.ne.s32.totalorder %s145, %s148
      %p157 = scmp.eq.s32.totalorder %s22, 3
      %p158 = por %p156, %p157
      %p159 = scmp.ne.s32.totalorder %s148, %s149
      %p160 = scmp.eq.s32.totalorder %s22, 0
      %p161 = por %p159, %p160
      %p162 = scmp.ne.s32.totalorder %s148, %s149
      %p163 = scmp.eq.s32.totalorder %s23, 3
      %p164 = por %p162, %p163
      %p166 = scmp.ne.s32.totalorder %s149, %s165
      %p167 = scmp.eq.s32.totalorder %s23, 0
      %p168 = por %p166, %p167
      %p169 = scmp.le.s32.totalorder 1, %s17
      %p170 = scmp.lt.s32.totalorder %s17, 5
      %p171 = pnand %p169, %p170
      %p172 = pneg %p171
      // Predicated region
      $region9: #{tpu_custom_call.1} parent=5 // pred_check
        _
      $region10: #{tpu_custom_call.1} parent=5 // pred_check_branch
        %174 = sbr.rel (%p171) target = $region12
      $region11: #{tpu_custom_call.1} parent=5 // pred_region
        %s175 = ssub.s32 %s17, 1
        // Predicated region
        $region13: #{tpu_custom_call.1} parent=11 // pred_check
          %p176 = pneg %p81
        $region14: #{tpu_custom_call.1} parent=11 // pred_check_branch
          %178 = sbr.rel (%p176) target = $region16
        $region15: #{tpu_custom_call.1} parent=11 // pred_region
          %s180 = ssub.s32 2048, 2048
          %181 = vsyncadd [#allocation6], %s180
          %s182 = smul.addr %s27, 64
          %s183 = scalar_lea.hbm %s1, %s182
          %s184 = sshll.u32 [#allocation5], 4
          %s185 = int_to_ptr.vmem [resolvable:$true] %s184
          %190 = dma.hbm_to_vmem [thread:$0]  %s183, 2048, %s185, [#allocation6], 64, 64, 4
        $region16: #{tpu_custom_call.1} parent=11 // pred_fallthru
          _
        // Predicated region
        $region17: #{tpu_custom_call.1} parent=11 // pred_check
          %p191 = pneg %p107
        $region18: #{tpu_custom_call.1} parent=11 // pred_check_branch
          %193 = sbr.rel (%p191) target = $region20
        $region19: #{tpu_custom_call.1} parent=11 // pred_region
          %p194 = scmp.lt.s32.totalorder %s27, 0
          %s195 = scalar_select %p194, %s27, 0
          %s196 = scalar_lea.vmem %s2, %s195
        $region20: #{tpu_custom_call.1} parent=11 // pred_fallthru
          _
        // Predicated region
        $region21: #{tpu_custom_call.1} parent=11 // pred_check
          %p197 = pneg %p133
        $region22: #{tpu_custom_call.1} parent=11 // pred_check_branch
          %199 = sbr.rel (%p197) target = $region24
        $region23: #{tpu_custom_call.1} parent=11 // pred_region
          %p200 = scmp.lt.s32.totalorder %s27, 0
          %s201 = scalar_select %p200, %s27, 0
          %s202 = scalar_lea.vmem %s3, %s201
        $region24: #{tpu_custom_call.1} parent=11 // pred_fallthru
          _
      $region12: #{tpu_custom_call.1} parent=5 // pred_fallthru
        _
      %p203 = scmp.lt.s32.totalorder %s17, 4
      // Predicated region
      $region25: #{tpu_custom_call.1} parent=5 // pred_check
        %p204 = pneg %p203
      $region26: #{tpu_custom_call.1} parent=5 // pred_check_branch
        %206 = sbr.rel (%p204) target = $region28
      $region27: #{tpu_custom_call.1} parent=5 // pred_region
        // Predicated region
        $region29: #{tpu_custom_call.1} parent=27 // pred_check
          %p207 = pneg %p49
        $region30: #{tpu_custom_call.1} parent=27 // pred_check_branch
          %209 = sbr.rel (%p207) target = $region32
        $region31: #{tpu_custom_call.1} parent=27 // pred_region
          %s210 = sand.u32 %s39, 1
          %s211 = scalar_lea.sflag [#allocation3], %s210
          %s212 = sand.u32 %s39, 1
          %s213 = smul.addr %s212, 128
          %s214 = scalar_lea.vmem [#allocation2], %s213
          %s215 = smul.u32 16, %s24
          %s217 = ssub.s32 2048, 2048
          %218 = vsyncadd %s211, %s217
          %s219 = smul.addr %s215, 2
          %s220 = smul.addr %s219, 64
          %s221 = scalar_lea.hbm %s0, %s220
          %s222 = sshll.u32 %s214, 4
          %s223 = int_to_ptr.vmem [resolvable:$true] %s222
          %228 = dma.hbm_to_vmem [thread:$0]  %s221, 2048, %s223, %s211, 128, 128, 8
        $region32: #{tpu_custom_call.1} parent=27 // pred_fallthru
          _
      $region28: #{tpu_custom_call.1} parent=5 // pred_fallthru
        _
      %p229 = scmp.le.s32.totalorder 1, %s17
      %p230 = scmp.lt.s32.totalorder %s17, 5
      %p231 = pnand %p229, %p230
      %p232 = pneg %p231
      // Predicated region
      $region33: #{tpu_custom_call.1} parent=5 // pred_check
        _
      $region34: #{tpu_custom_call.1} parent=5 // pred_check_branch
        %234 = sbr.rel (%p231) target = $region36
      $region35: #{tpu_custom_call.1} parent=5 // pred_region
        %s235 = ssub.s32 %s17, 1
        %s236 = sand.u32 %s42, 1
        %s237 = scalar_lea.sflag [#allocation3], %s236
        %s238 = sand.u32 %s42, 1
        %s239 = smul.addr %s238, 128
        %s240 = scalar_lea.vmem [#allocation2], %s239
        // Predicated region
        $region37: #{tpu_custom_call.1} parent=35 // pred_check
          %p241 = pneg %p55
        $region38: #{tpu_custom_call.1} parent=35 // pred_check_branch
          %243 = sbr.rel (%p241) target = $region40
        $region39: #{tpu_custom_call.1} parent=35 // pred_region
          %244 = dma.done %s237, 2048
        $region40: #{tpu_custom_call.1} parent=35 // pred_fallthru
          _
        // Predicated region
        $region41: #{tpu_custom_call.1} parent=35 // pred_check
          %p245 = pneg %p81
        $region42: #{tpu_custom_call.1} parent=35 // pred_check_branch
          %247 = sbr.rel (%p245) target = $region44
        $region43: #{tpu_custom_call.1} parent=35 // pred_region
          %248 = dma.done [#allocation6], 2048
        $region44: #{tpu_custom_call.1} parent=35 // pred_fallthru
          _
        %s249 = sand.u32 %s42, 1
        %s250 = scalar_lea.sflag [#allocation3], %s249
        %s251 = sand.u32 %s42, 1
        %s252 = smul.addr %s251, 128
        %s253 = scalar_lea.vmem [#allocation2], %s252
        %p254 = pneg %p55
        %p255 = pneg %p52
        %p256 = pneg %p81
        %p257 = pneg %p78
        %p258 = scmp.lt.s32.totalorder %s27, 0
        %s259 = scalar_select %p258, %s27, 0
        %s260 = scalar_lea.vmem %s2, %s259
        %p261 = pneg %p107
        %p262 = pneg %p104
        %p263 = scmp.lt.s32.totalorder %s27, 0
        %s264 = scalar_select %p263, %s27, 0
        %s265 = scalar_lea.vmem %s3, %s264
        %p266 = pneg %p133
        %p267 = pneg %p130
        %p268 = pneg %p161
        %p269 = pneg %p158
        %s270 = sand.u32 %s148, 1
        %s271 = scalar_lea.sflag [#allocation4], %s270
        %s272 = sand.u32 %s148, 1
        %s273 = smul.addr %s272, 128
        %s274 = scalar_lea.vmem [#allocation7], %s273
        %s275 = smul.u32 16, %s26
        %p276 = scmp.lt.s32.totalorder %s27, 0
        %s277 = scalar_select %p276, %s27, 0
        %s278 = scalar_lea.vmem %s2, %s277
        %p279 = scmp.lt.s32.totalorder %s27, 0
        %s280 = scalar_select %p279, %s27, 0
        %s281 = scalar_lea.vmem %s3, %s280
        %s282 = smul.u32 16, %s26
        %v284 = vld [vmem:[%s240] sm:$0xff]
        %v285 = vld [vmem:[%s240 + $0x8] sm:$0xff]
        %v286 = vld [vmem:[%s240 + $0x10] sm:$0xff]
        %v287 = vld [vmem:[%s240 + $0x18] sm:$0xff]
        %v288 = vld [vmem:[%s240 + $0x20] sm:$0xff]
        %v289 = vld [vmem:[%s240 + $0x28] sm:$0xff]
        %v290 = vld [vmem:[%s240 + $0x30] sm:$0xff]
        %v291 = vld [vmem:[%s240 + $0x38] sm:$0xff]
        %v292 = vld [vmem:[%s240 + $0x40] sm:$0xff]
        %v293 = vld [vmem:[%s240 + $0x48] sm:$0xff]
        %v294 = vld [vmem:[%s240 + $0x50] sm:$0xff]
        %v295 = vld [vmem:[%s240 + $0x58] sm:$0xff]
        %v296 = vld [vmem:[%s240 + $0x60] sm:$0xff]
        %v297 = vld [vmem:[%s240 + $0x68] sm:$0xff]
        %v298 = vld [vmem:[%s240 + $0x70] sm:$0xff]
        %v299 = vld [vmem:[%s240 + $0x78] sm:$0xff]
        %v300 = vld [vmem:[#allocation5] sm:$0xf]
        %v301 = vld [vmem:[#allocation5 + $0x4] sm:$0xf]
        %v302 = vld [vmem:[#allocation5 + $0x8] sm:$0xf]
        %v303 = vld [vmem:[#allocation5 + $0xc] sm:$0xf]
        %v304 = vld [vmem:[#allocation5 + $0x10] sm:$0xf]
        %v305 = vld [vmem:[#allocation5 + $0x14] sm:$0xf]
        %v306 = vld [vmem:[#allocation5 + $0x18] sm:$0xf]
        %v307 = vld [vmem:[#allocation5 + $0x1c] sm:$0xf]
        %v308 = vld [vmem:[#allocation5 + $0x20] sm:$0xf]
        %v309 = vld [vmem:[#allocation5 + $0x24] sm:$0xf]
        %v310 = vld [vmem:[#allocation5 + $0x28] sm:$0xf]
        %v311 = vld [vmem:[#allocation5 + $0x2c] sm:$0xf]
        %v312 = vld [vmem:[#allocation5 + $0x30] sm:$0xf]
        %v313 = vld [vmem:[#allocation5 + $0x34] sm:$0xf]
        %v314 = vld [vmem:[#allocation5 + $0x38] sm:$0xf]
        %v315 = vld [vmem:[#allocation5 + $0x3c] sm:$0xf]
        %v316 = vld [vmem:[#allocation5 + $0x40] sm:$0xf]
        %v317 = vld [vmem:[#allocation5 + $0x44] sm:$0xf]
        %v318 = vld [vmem:[#allocation5 + $0x48] sm:$0xf]
        %v319 = vld [vmem:[#allocation5 + $0x4c] sm:$0xf]
        %v320 = vld [vmem:[#allocation5 + $0x50] sm:$0xf]
        %v321 = vld [vmem:[#allocation5 + $0x54] sm:$0xf]
        %v322 = vld [vmem:[#allocation5 + $0x58] sm:$0xf]
        %v323 = vld [vmem:[#allocation5 + $0x5c] sm:$0xf]
        %v324 = vld [vmem:[#allocation5 + $0x60] sm:$0xf]
        %v325 = vld [vmem:[#allocation5 + $0x64] sm:$0xf]
        %v326 = vld [vmem:[#allocation5 + $0x68] sm:$0xf]
        %v327 = vld [vmem:[#allocation5 + $0x6c] sm:$0xf]
        %v328 = vld [vmem:[#allocation5 + $0x70] sm:$0xf]
        %v329 = vld [vmem:[#allocation5 + $0x74] sm:$0xf]
        %v330 = vld [vmem:[#allocation5 + $0x78] sm:$0xf]
        %v331 = vld [vmem:[#allocation5 + $0x7c] sm:$0xf]
        %v348 = vunpack.c.l.b16 %v284
        %v349 = vunpack.c.h.b16 %v284
        %v350 = vunpack.c.l.b16 %v285
        %v351 = vunpack.c.h.b16 %v285
        %v352 = vunpack.c.l.b16 %v286
        %v353 = vunpack.c.h.b16 %v286
        %v354 = vunpack.c.l.b16 %v287
        %v355 = vunpack.c.h.b16 %v287
        %v356 = vunpack.c.l.b16 %v288
        %v357 = vunpack.c.h.b16 %v288
        %v358 = vunpack.c.l.b16 %v289
        %v359 = vunpack.c.h.b16 %v289
        %v360 = vunpack.c.l.b16 %v290
        %v361 = vunpack.c.h.b16 %v290
        %v362 = vunpack.c.l.b16 %v291
        %v363 = vunpack.c.h.b16 %v291
        %v364 = vunpack.c.l.b16 %v292
        %v365 = vunpack.c.h.b16 %v292
        %v366 = vunpack.c.l.b16 %v293
        %v367 = vunpack.c.h.b16 %v293
        %v368 = vunpack.c.l.b16 %v294
        %v369 = vunpack.c.h.b16 %v294
        %v370 = vunpack.c.l.b16 %v295
        %v371 = vunpack.c.h.b16 %v295
        %v372 = vunpack.c.l.b16 %v296
        %v373 = vunpack.c.h.b16 %v296
        %v374 = vunpack.c.l.b16 %v297
        %v375 = vunpack.c.h.b16 %v297
        %v376 = vunpack.c.l.b16 %v298
        %v377 = vunpack.c.h.b16 %v298
        %v378 = vunpack.c.l.b16 %v299
        %v379 = vunpack.c.h.b16 %v299
        %v380 = vpack.c.b16 %v350, %v348
        %v381 = vpack.c.b16 %v351, %v349
        %v382 = vpack.c.b16 %v354, %v352
        %v383 = vpack.c.b16 %v355, %v353
        %v384 = vpack.c.b16 %v358, %v356
        %v385 = vpack.c.b16 %v359, %v357
        %v386 = vpack.c.b16 %v362, %v360
        %v387 = vpack.c.b16 %v363, %v361
        %v388 = vpack.c.b16 %v366, %v364
        %v389 = vpack.c.b16 %v367, %v365
        %v390 = vpack.c.b16 %v370, %v368
        %v391 = vpack.c.b16 %v371, %v369
        %v392 = vpack.c.b16 %v374, %v372
        %v393 = vpack.c.b16 %v375, %v373
        %v394 = vpack.c.b16 %v378, %v376
        %v395 = vpack.c.b16 %v379, %v377
        %v444 = vunpack.c.l.b16 %v300
        %v445 = vunpack.c.l.b16 %v301
        %v446 = vunpack.c.l.b16 %v302
        %v447 = vunpack.c.l.b16 %v303
        %v448 = vunpack.c.l.b16 %v304
        %v449 = vunpack.c.l.b16 %v305
        %v450 = vunpack.c.l.b16 %v306
        %v451 = vunpack.c.l.b16 %v307
        %v452 = vunpack.c.l.b16 %v308
        %v453 = vunpack.c.l.b16 %v309
        %v454 = vunpack.c.l.b16 %v310
        %v455 = vunpack.c.l.b16 %v311
        %v456 = vunpack.c.l.b16 %v312
        %v457 = vunpack.c.l.b16 %v313
        %v458 = vunpack.c.l.b16 %v314
        %v459 = vunpack.c.l.b16 %v315
        %v460 = vunpack.c.l.b16 %v316
        %v461 = vunpack.c.l.b16 %v317
        %v462 = vunpack.c.l.b16 %v318
        %v463 = vunpack.c.l.b16 %v319
        %v464 = vunpack.c.l.b16 %v320
        %v465 = vunpack.c.l.b16 %v321
        %v466 = vunpack.c.l.b16 %v322
        %v467 = vunpack.c.l.b16 %v323
        %v468 = vunpack.c.l.b16 %v324
        %v469 = vunpack.c.l.b16 %v325
        %v470 = vunpack.c.l.b16 %v326
        %v471 = vunpack.c.l.b16 %v327
        %v472 = vunpack.c.l.b16 %v328
        %v473 = vunpack.c.l.b16 %v329
        %v474 = vunpack.c.l.b16 %v330
        %v475 = vunpack.c.l.b16 %v331
        %v476 = vpack.c.b16 %v445, %v444
        %v477 = vpack.c.b16 %v447, %v446
        %v478 = vpack.c.b16 %v449, %v448
        %v479 = vpack.c.b16 %v451, %v450
        %v480 = vpack.c.b16 %v453, %v452
        %v481 = vpack.c.b16 %v455, %v454
        %v482 = vpack.c.b16 %v457, %v456
        %v483 = vpack.c.b16 %v459, %v458
        %v484 = vpack.c.b16 %v461, %v460
        %v485 = vpack.c.b16 %v463, %v462
        %v486 = vpack.c.b16 %v465, %v464
        %v487 = vpack.c.b16 %v467, %v466
        %v488 = vpack.c.b16 %v469, %v468
        %v489 = vpack.c.b16 %v471, %v470
        %v490 = vpack.c.b16 %v473, %v472
        %v491 = vpack.c.b16 %v475, %v474
        %508 = vmatprep.subr.bf16.mxu0 0
        %509 = vmatpush1.bf16.msra.mxu0 %v476
        %510 = vmatprep.subr.bf16.mxu0 0
        %511 = vmatpush1.bf16.msra.mxu0 %v477
        %512 = vmatprep.subr.bf16.mxu0 0
        %513 = vmatpush1.bf16.msra.mxu0 %v478
        %514 = vmatprep.subr.bf16.mxu0 0
        %515 = vmatpush1.bf16.msra.mxu0 %v479
        %516 = vmatprep.subr.bf16.mxu0 0
        %517 = vmatpush1.bf16.msra.mxu0 %v480
        %518 = vmatprep.subr.bf16.mxu0 0
        %519 = vmatpush1.bf16.msra.mxu0 %v481
        %520 = vmatprep.subr.bf16.mxu0 0
        %521 = vmatpush1.bf16.msra.mxu0 %v482
        %522 = vmatprep.subr.bf16.mxu0 0
        %523 = vmatpush1.bf16.msra.mxu0 %v483
        %524 = vmatprep.subr.bf16.mxu0 0
        %525 = vmatpush1.bf16.msra.mxu0 %v484
        %526 = vmatprep.subr.bf16.mxu0 0
        %527 = vmatpush1.bf16.msra.mxu0 %v485
        %528 = vmatprep.subr.bf16.mxu0 0
        %529 = vmatpush1.bf16.msra.mxu0 %v486
        %530 = vmatprep.subr.bf16.mxu0 0
        %531 = vmatpush1.bf16.msra.mxu0 %v487
        %532 = vmatprep.subr.bf16.mxu0 0
        %533 = vmatpush1.bf16.msra.mxu0 %v488
        %534 = vmatprep.subr.bf16.mxu0 0
        %535 = vmatpush1.bf16.msra.mxu0 %v489
        %536 = vmatprep.subr.bf16.mxu0 0
        %537 = vmatpush1.bf16.msra.mxu0 %v490
        %538 = vmatprep.subr.bf16.mxu0 0
        %539 = vmatpush1.bf16.msra.mxu0 %v491
        %540 = vmatprep.mubr.bf16.mxu0 %v381
        %541 = vmatmul.mubr.bf16.gmra.mrb[0].mxu0 %v380
        %v542 = vpop.f32.mrb[0].mxu0
        %v543 = vadd.f32 0.0, %v542
        %v544 = vpop.f32.mrb[0].mxu0
        %v545 = vpop.f32.mrb[0].mxu0
        %v546 = vadd.f32 0.0, %v545
        %v547 = vpop.f32.mrb[0].mxu0
        %548 = vmatprep.mubr.bf16.mxu0 %v383
        %549 = vmatmul.mubr.bf16.gmra.mrb[0].mxu0 %v382
        %v550 = vpop.f32.mrb[0].mxu0
        %v551 = vadd.f32 0.0, %v550
        %v552 = vpop.f32.mrb[0].mxu0
        %v553 = vpop.f32.mrb[0].mxu0
        %v554 = vadd.f32 0.0, %v553
        %v555 = vpop.f32.mrb[0].mxu0
        %556 = vmatprep.mubr.bf16.mxu0 %v385
        %557 = vmatmul.mubr.bf16.gmra.mrb[0].mxu0 %v384
        %v558 = vpop.f32.mrb[0].mxu0
        %v559 = vadd.f32 0.0, %v558
        %v560 = vpop.f32.mrb[0].mxu0
        %v561 = vpop.f32.mrb[0].mxu0
        %v562 = vadd.f32 0.0, %v561
        %v563 = vpop.f32.mrb[0].mxu0
        %564 = vmatprep.mubr.bf16.mxu0 %v387
        %565 = vmatmul.mubr.bf16.gmra.mrb[0].mxu0 %v386
        %v566 = vpop.f32.mrb[0].mxu0
        %v567 = vadd.f32 0.0, %v566
        %v568 = vpop.f32.mrb[0].mxu0
        %v569 = vpop.f32.mrb[0].mxu0
        %v570 = vadd.f32 0.0, %v569
        %v571 = vpop.f32.mrb[0].mxu0
        %572 = vmatprep.mubr.bf16.mxu0 %v389
        %573 = vmatmul.mubr.bf16.gmra.mrb[0].mxu0 %v388
        %v574 = vpop.f32.mrb[0].mxu0
        %v575 = vadd.f32 0.0, %v574
        %v576 = vpop.f32.mrb[0].mxu0
        %v577 = vpop.f32.mrb[0].mxu0
        %v578 = vadd.f32 0.0, %v577
        %v579 = vpop.f32.mrb[0].mxu0
        %580 = vmatprep.mubr.bf16.mxu0 %v391
        %581 = vmatmul.mubr.bf16.gmra.mrb[0].mxu0 %v390
        %v582 = vpop.f32.mrb[0].mxu0
        %v583 = vadd.f32 0.0, %v582
        %v584 = vpop.f32.mrb[0].mxu0
        %v585 = vpop.f32.mrb[0].mxu0
        %v586 = vadd.f32 0.0, %v585
        %v587 = vpop.f32.mrb[0].mxu0
        %588 = vmatprep.mubr.bf16.mxu0 %v393
        %589 = vmatmul.mubr.bf16.gmra.mrb[0].mxu0 %v392
        %v590 = vpop.f32.mrb[0].mxu0
        %v591 = vadd.f32 0.0, %v590
        %v592 = vpop.f32.mrb[0].mxu0
        %v593 = vpop.f32.mrb[0].mxu0
        %v594 = vadd.f32 0.0, %v593
        %v595 = vpop.f32.mrb[0].mxu0
        %596 = vmatprep.mubr.bf16.mxu0 %v395
        %597 = vmatmul.mubr.bf16.gmra.mrb[0].mxu0 %v394
        %v598 = vpop.f32.mrb[0].mxu0
        %v599 = vadd.f32 0.0, %v598
        %v600 = vpop.f32.mrb[0].mxu0
        %v601 = vpop.f32.mrb[0].mxu0
        %v602 = vadd.f32 0.0, %v601
        %v603 = vpop.f32.mrb[0].mxu0
        %604 = vdwg.mxu0
        %v605 = vld [vmem:[%s278] sm:$0x1]
        %v607 = vlaneseq
        %v608 = vshrl.u32 %v607, 7
        %v609 = vsub.s32 0, %v608
        %v610 = vrot.slane %v605, %v609
        %v612 = vmul.f32 %v543, %v610
        %v613 = vmul.f32 %v546, %v610
        %v614 = vmul.f32 %v551, %v610
        %v615 = vmul.f32 %v554, %v610
        %v616 = vmul.f32 %v559, %v610
        %v617 = vmul.f32 %v562, %v610
        %v618 = vmul.f32 %v567, %v610
        %v619 = vmul.f32 %v570, %v610
        %v620 = vmul.f32 %v575, %v610
        %v621 = vmul.f32 %v578, %v610
        %v622 = vmul.f32 %v583, %v610
        %v623 = vmul.f32 %v586, %v610
        %v624 = vmul.f32 %v591, %v610
        %v625 = vmul.f32 %v594, %v610
        %v626 = vmul.f32 %v599, %v610
        %v627 = vmul.f32 %v602, %v610
        %v628 = vld [vmem:[%s281] sm:$0x1]
        %v630 = vlaneseq
        %v631 = vshrl.u32 %v630, 7
        %v632 = vsub.s32 0, %v631
        %v633 = vrot.slane %v628, %v632
        %v635 = vadd.f32 %v612, %v633
        %v636 = vadd.f32 %v613, %v633
        %v637 = vadd.f32 %v614, %v633
        %v638 = vadd.f32 %v615, %v633
        %v639 = vadd.f32 %v616, %v633
        %v640 = vadd.f32 %v617, %v633
        %v641 = vadd.f32 %v618, %v633
        %v642 = vadd.f32 %v619, %v633
        %v643 = vadd.f32 %v620, %v633
        %v644 = vadd.f32 %v621, %v633
        %v645 = vadd.f32 %v622, %v633
        %v646 = vadd.f32 %v623, %v633
        %v647 = vadd.f32 %v624, %v633
        %v648 = vadd.f32 %v625, %v633
        %v649 = vadd.f32 %v626, %v633
        %v650 = vadd.f32 %v627, %v633
        %v651 = vmax.f32 %v635, 0.0
        %v652 = vmax.f32 %v636, 0.0
        %v653 = vmax.f32 %v637, 0.0
        %v654 = vmax.f32 %v638, 0.0
        %v655 = vmax.f32 %v639, 0.0
        %v656 = vmax.f32 %v640, 0.0
        %v657 = vmax.f32 %v641, 0.0
        %v658 = vmax.f32 %v642, 0.0
        %v659 = vmax.f32 %v643, 0.0
        %v660 = vmax.f32 %v644, 0.0
        %v661 = vmax.f32 %v645, 0.0
        %v662 = vmax.f32 %v646, 0.0
        %v663 = vmax.f32 %v647, 0.0
        %v664 = vmax.f32 %v648, 0.0
        %v665 = vmax.f32 %v649, 0.0
        %v666 = vmax.f32 %v650, 0.0
        %667 = vst [vmem:[%s274] sm:$0xff] %v651
        %668 = vst [vmem:[%s274 + $0x8] sm:$0xff] %v652
        %669 = vst [vmem:[%s274 + $0x10] sm:$0xff] %v653
        %670 = vst [vmem:[%s274 + $0x18] sm:$0xff] %v654
        %671 = vst [vmem:[%s274 + $0x20] sm:$0xff] %v655
        %672 = vst [vmem:[%s274 + $0x28] sm:$0xff] %v656
        %673 = vst [vmem:[%s274 + $0x30] sm:$0xff] %v657
        %674 = vst [vmem:[%s274 + $0x38] sm:$0xff] %v658
        %675 = vst [vmem:[%s274 + $0x40] sm:$0xff] %v659
        %676 = vst [vmem:[%s274 + $0x48] sm:$0xff] %v660
        %677 = vst [vmem:[%s274 + $0x50] sm:$0xff] %v661
        %678 = vst [vmem:[%s274 + $0x58] sm:$0xff] %v662
        %679 = vst [vmem:[%s274 + $0x60] sm:$0xff] %v663
        %680 = vst [vmem:[%s274 + $0x68] sm:$0xff] %v664
        %681 = vst [vmem:[%s274 + $0x70] sm:$0xff] %v665
        %682 = vst [vmem:[%s274 + $0x78] sm:$0xff] %v666
        %s683 = sand.u32 %s148, 1
        %s684 = scalar_lea.sflag [#allocation4], %s683
        %s685 = sand.u32 %s148, 1
        %s686 = smul.addr %s685, 128
        %s687 = scalar_lea.vmem [#allocation7], %s686
        // Predicated region
        $region45: #{tpu_custom_call.1} parent=35 // pred_check
          %p688 = pneg %p158
        $region46: #{tpu_custom_call.1} parent=35 // pred_check_branch
          %690 = sbr.rel (%p688) target = $region48
        $region47: #{tpu_custom_call.1} parent=35 // pred_region
          %s691 = smul.u32 16, %s26
          %s693 = ssub.s32 2048, 2048
          %694 = vsyncadd %s684, %s693
          %s695 = sadd.s32 %s27, %s691
          %s696 = smul.addr %s695, 128
          %s697 = scalar_lea.hbm %s4, %s696
          %s698 = sshll.u32 %s687, 4
          %s699 = int_to_ptr.vmem [resolvable:$true] %s698
          %704 = dma.vmem_to_hbm [thread:$0]  %s699, 2048, %s697, %s684, 128, 128, 8
        $region48: #{tpu_custom_call.1} parent=35 // pred_fallthru
          _
      $region36: #{tpu_custom_call.1} parent=5 // pred_fallthru
        _
      %p705 = scmp.le.s32.totalorder 2, %s17
      // Predicated region
      $region49: #{tpu_custom_call.1} parent=5 // pred_check
        %p706 = pneg %p705
      $region50: #{tpu_custom_call.1} parent=5 // pred_check_branch
        %708 = sbr.rel (%p706) target = $region52
      $region51: #{tpu_custom_call.1} parent=5 // pred_region
        %s709 = ssub.s32 %s17, 2
        // Predicated region
        $region53: #{tpu_custom_call.1} parent=51 // pred_check
          %p710 = pneg %p164
        $region54: #{tpu_custom_call.1} parent=51 // pred_check_branch
          %712 = sbr.rel (%p710) target = $region56
        $region55: #{tpu_custom_call.1} parent=51 // pred_region
          %s713 = sand.u32 %s149, 1
          %s714 = scalar_lea.sflag [#allocation4], %s713
          %s715 = sand.u32 %s149, 1
          %s716 = smul.addr %s715, 128
          %s717 = scalar_lea.vmem [#allocation7], %s716
          %718 = dma.done %s714, 2048
        $region56: #{tpu_custom_call.1} parent=51 // pred_fallthru
          _
      $region52: #{tpu_custom_call.1} parent=5 // pred_fallthru
        _
    $region6: #{tpu_custom_call.1} parent=1 // loop_footer
      %s21 = sadd.s32 1, %s17
    $region7: #{tpu_custom_call.1} parent=1 // loop_footer_branch
      %16 = sbr.rel target = $region3
    $region8: #{tpu_custom_call.1} parent=1 // loop_exit
      _
    %719 = vsyncpa [#allocation3], 1
    %s720 = scalar_lea.sflag [#allocation3], 1
    %721 = vsyncpa %s720, 1
    %722 = vsyncpa [#allocation6], 1
    %723 = vsyncpa [#allocation4], 1
    %s724 = scalar_lea.sflag [#allocation4], 1
    %725 = vsyncpa %s724, 1

</llo_original>
